<compile_context>
chip_gen: v7x
topology: tpu7x:2x2x1
jax: 0.10.0
libtpu: 0.0.40
codegen_flags: <defaults>
</compile_context>

<pallas_src>
import numpy as np
import jax
import jax.numpy as jnp
from jax.experimental import pallas as pl
from jax.experimental.pallas import tpu as pltpu


def _copy_kernel(x_ref, o_ref):
    # Pure pass-through: copy the current VMEM tile (full-vreg loads/stores).
    o_ref[...] = x_ref[...]


def _sublane_multiple(dtype) -> int:
    # Native sublane packing: 8 rows for 32-bit, 16 for 16-bit, 32 for 8-bit.
    itemsize = jnp.dtype(dtype).itemsize
    return {4: 8, 2: 16, 1: 32}.get(itemsize, 8)


def _lane_dense_shape(total, sub):
    """Pick (R, C) with C a large multiple of 128; prefer R % sub == 0 too."""
    candidates = (4096, 2048, 1024, 512, 256, 128)
    # First pass: lane-dense AND sublane-aligned rows.
    for c in candidates:
        if total % c == 0 and (total // c) % sub == 0:
            return total // c, c
    # Second pass: lane-dense only (Pallas pads partial sublane tiles).
    for c in candidates:
        if total % c == 0:
            return total // c, c
    return None


def _choose_tiles(R, C, itemsize, sub, target_tile_bytes=4 * 1024 * 1024):
    # Lane (last) dim: large multiple of 128 when possible, else full extent
    # (a full-extent last dim is legal even when C % 128 != 0).
    if C % 128 == 0:
        tc = min(C, 4096)
    else:
        tc = C
    # Sublane (rows) dim: multiple of `sub`, sized so one tile is ~4 MiB,
    # or full extent when the whole row range already fits the budget.
    if R <= sub:
        tr = R
    else:
        budget_rows = max(sub, (target_tile_bytes // max(1, tc * itemsize)) // sub * sub)
        tr = R if R <= budget_rows else budget_rows
    return tr, tc


def identity(x):
    """Identity.forward — semantically just `return x` (zero cost, no kernel)."""
    return x


def identity_copy(x):
    """Materialized copy of x via a tiled, aliased Pallas memcpy kernel."""
    orig_shape = x.shape
    dtype = x.dtype
    total = 1
    for d in orig_shape:
        total *= int(d)

    # Degenerate cases: scalar / zero-sized — identity semantics, no kernel.
    if x.ndim == 0 or total == 0:
        return x

    sub = _sublane_multiple(dtype)
    itemsize = jnp.dtype(dtype).itemsize

    dense = _lane_dense_shape(total, sub)
    if dense is not None:
        R, C = dense
    else:
        # total not a multiple of 128: fall back to the natural (leading, last)
        # flatten; rows are still tiled so VMEM stays bounded.
        C = int(orig_shape[-1])
        R = total // C

    flat = x.reshape(R, C)
    tr, tc = _choose_tiles(R, C, itemsize, sub)
    grid = (pl.cdiv(R, tr), pl.cdiv(C, tc))

    out = pl.pallas_call(
        _copy_kernel,
        out_shape=jax.ShapeDtypeStruct((R, C), dtype),
        grid=grid,
        in_specs=[pl.BlockSpec((tr, tc), lambda i, j: (i, j))],
        out_specs=pl.BlockSpec((tr, tc), lambda i, j: (i, j)),
        input_output_aliases={0: 0},
        compiler_params=pltpu.CompilerParams(
            dimension_semantics=("parallel", "parallel"),
        ),
    )(flat)

    return out.reshape(orig_shape)


if __name__ == "__main__":
    key = jax.random.PRNGKey(0)
    # NCHW input, consistent with the PyTorch conv-style module family.
    x = jax.random.normal(key, (2, 4, 16, 16), dtype=jnp.float32)
    x_snapshot = np.asarray(x)  # host copy, immune to any buffer aliasing

    # Zero-cost path (what Identity.forward really is).
    y0 = identity(x)
    assert y0 is x

    # Pallas memcpy path (exercises the kernel).
    y = identity_copy(x)
    jax.block_until_ready(y)

    assert y.shape == x_snapshot.shape
    assert y.dtype == x_snapshot.dtype
    assert np.array_equal(np.asarray(y), x_snapshot)

    print("KERNEL_OK")
</pallas_src>

<mosaic_0001>
module attributes {stable_mosaic.version = 11 : i64} {
  func.func @_copy_kernel(%arg0: i32, %arg1: i32, %arg2: memref<8x256xf32, #tpu.memory_space<vmem>>, %arg3: memref<8x256xf32, #tpu.memory_space<vmem>>) attributes {dimension_semantics = [#tpu.dimension_semantics<parallel>, #tpu.dimension_semantics<parallel>], iteration_bounds = array<i64: 1, 1>, scalar_prefetch = 0 : i64, scratch_operands = 0 : i64, tpu.core_type = #tpu.core_type<tc>, window_params = [{transform_indices = @transform_0, window_bounds = array<i64: 8, 256>}, {transform_indices = @transform_1, window_bounds = array<i64: 8, 256>}]} {
    %c0 = arith.constant 0 : index
    %c0_0 = arith.constant 0 : index
    %0 = vector.load %arg2[%c0, %c0_0] : memref<8x256xf32, #tpu.memory_space<vmem>>, vector<8x256xf32>
    %c0_1 = arith.constant 0 : index
    %c0_2 = arith.constant 0 : index
    %1 = vector.load %arg3[%c0_1, %c0_2] : memref<8x256xf32, #tpu.memory_space<vmem>>, vector<8x256xf32>
    tpu.vector_store %arg3[%c0_1, %c0_2], %0 {strides = array<i32>} : memref<8x256xf32, #tpu.memory_space<vmem>>, vector<8x256xf32>,
    return
  }
  func.func @transform_0(%arg0: i32, %arg1: i32) -> (i32, i32) {
    %c0_i32 = arith.constant 0 : i32
    return %arg0, %arg1 : i32, i32
  }
  func.func @transform_1(%arg0: i32, %arg1: i32) -> (i32, i32) {
    %c0_i32 = arith.constant 0 : i32
    return %arg0, %arg1 : i32, i32
  }
}

</mosaic_0001>

<llo_original>
// kernel: tpu_custom_call.1
$region0: #{tpu_custom_call.1}
  #allocation0 [shape = 'u32[]', space=smem, size = 0x4, offset = 0x4, fixed_abs, tag = 'smem constant byte address 0x4 - core index']
  #allocation1 [shape = 'u32[144,128]{1,0:T(1,128)}', space=vmem, size = 0x12000, scoped, tag = 'internal scratch']
  %s0 = inlined_call_operand.hbm [shape: f32[8,256], index: 0, kind: input, shape index: {}, may-alias: {0,1}]
  %s1 = inlined_call_operand.hbm [shape: f32[8,256], index: 1, kind: output, shape index: {}, may-alias: {0,1}]
  %s2 = sld [smem:[#allocation0]]
  $region18: #{tpu_custom_call.1} parent=0
    _
  %s4 = ssub.s32 1, %s2
  %s5 = scalar_select 0, %s4, %s2
  $region1: #{tpu_custom_call.1} parent=0
    #allocation2 [shape = 'u8[8192]{0}', space=vmem, size = 0x2000, scoped, tag = 'input window, operand 0, single buffered']
    #allocation3 [shape = 's32[1]{0}', space=sflag, size = 0x4, scoped, tag = 'scoped memory for tpu_custom_call.1']
    #allocation4 [shape = 's32[1]{0}', space=sflag, size = 0x4, scoped, tag = 'scoped memory for tpu_custom_call.1']
    #allocation5 [shape = 'u8[8192]{0}', space=vmem, size = 0x2000, scoped, tag = 'output window, operand 0, single buffered']
    %6 = vsyncpa [#allocation3], 0
    %7 = vsyncpa [#allocation4], 0
    // Predicated region
    $region2: #{tpu_custom_call.1} parent=1 // pred_check
      _
    $region3: #{tpu_custom_call.1} parent=1 // pred_check_branch
      %9 = sbr.rel (0) target = $region5
    $region4: #{tpu_custom_call.1} parent=1 // pred_region
      %s11 = ssub.s32 256, 256
      %12 = vsyncadd [#allocation3], %s11
      %s14 = sshll.u32 [#allocation2], 4
      %s15 = int_to_ptr.vmem [resolvable:$true] %s14
      %17 = dma.hbm_to_vmem [thread:$0]  %s0, 256, %s15, [#allocation3]
    $region5: #{tpu_custom_call.1} parent=1 // pred_fallthru
      _
    // Predicated region
    $region6: #{tpu_custom_call.1} parent=1 // pred_check
      _
    $region7: #{tpu_custom_call.1} parent=1 // pred_check_branch
      %19 = sbr.rel (0) target = $region9
    $region8: #{tpu_custom_call.1} parent=1 // pred_region
      %20 = dma.done [#allocation3], 256
    $region9: #{tpu_custom_call.1} parent=1 // pred_fallthru
      _
    %v21 = vld [vmem:[#allocation2] sm:$0xff]
    %v22 = vld [vmem:[#allocation2 + $0x8] sm:$0xff]
    %23 = vst [vmem:[#allocation5] sm:$0xff] %v21
    %24 = vst [vmem:[#allocation5 + $0x8] sm:$0xff] %v22
    // Predicated region
    $region10: #{tpu_custom_call.1} parent=1 // pred_check
      _
    $region11: #{tpu_custom_call.1} parent=1 // pred_check_branch
      %26 = sbr.rel (0) target = $region13
    $region12: #{tpu_custom_call.1} parent=1 // pred_region
      %s28 = ssub.s32 256, 256
      %29 = vsyncadd [#allocation4], %s28
      %s31 = sshll.u32 [#allocation5], 4
      %s32 = int_to_ptr.vmem [resolvable:$true] %s31
      %34 = dma.vmem_to_hbm [thread:$0]  %s32, 256, %s1, [#allocation4]
    $region13: #{tpu_custom_call.1} parent=1 // pred_fallthru
      _
    // Predicated region
    $region14: #{tpu_custom_call.1} parent=1 // pred_check
      _
    $region15: #{tpu_custom_call.1} parent=1 // pred_check_branch
      %36 = sbr.rel (0) target = $region17
    $region16: #{tpu_custom_call.1} parent=1 // pred_region
      %37 = dma.done [#allocation4], 256
    $region17: #{tpu_custom_call.1} parent=1 // pred_fallthru
      _
    %38 = vsyncpa [#allocation3], 1
    %39 = vsyncpa [#allocation4], 1

</llo_original>
